<compile_context>
chip_gen: v6e
topology: v6e:2x2x1
jax: 0.10.0
libtpu: 0.0.40
codegen_flags: <defaults>
</compile_context>

<pallas_src>
import numpy as np
import jax
import jax.numpy as jnp
from jax.experimental import pallas as pl
from jax.experimental.pallas import tpu as pltpu


def _round_up(x: int, m: int) -> int:
    return (x + m - 1) // m * m


def make_dft_basis(n_fft: int, f_pad: int, dtype=jnp.float32):
    """torchlibrosa STFT conv weights (periodic hann * DFT basis), real|imag concatenated along
    the frequency axis, each half zero-padded to f_pad lanes."""
    n = np.arange(n_fft, dtype=np.float64)
    window = 0.5 - 0.5 * np.cos(2.0 * np.pi * n / n_fft)          # periodic hann
    n_freq = n_fft // 2 + 1
    k = np.arange(n_freq, dtype=np.float64)
    ang = 2.0 * np.pi * np.outer(n, k) / n_fft                    # (n_fft, F)
    w = np.zeros((n_fft, 2 * f_pad), dtype=np.float32)
    w[:, :n_freq] = np.cos(ang) * window[:, None]                 # real part
    w[:, f_pad:f_pad + n_freq] = -np.sin(ang) * window[:, None]   # imag part
    return jnp.asarray(w, dtype=dtype)


def _make_kernel(k_chunks: int, chunk: int, f_pad: int, t_tile: int, x_block_is_full: bool):
    """Kernel: out[t_tile, f_pad] = |frames @ W|^2 with W = [W_real | W_imag] (each f_pad wide).

    If x_block_is_full, x_ref is the whole per-batch hop-slab (n_hops, chunk) and frames are built
    implicitly: frames @ W == sum_s hops[t0+s : t0+s+t_tile] @ W[s*chunk:(s+1)*chunk].
    Otherwise x_ref is an already-framed (t_tile, n_fft) tile and k_chunks == 1.
    """
    def kernel(x_ref, w_ref, out_ref):
        acc = jnp.zeros((t_tile, 2 * f_pad), jnp.float32)
        if x_block_is_full:
            t0 = pl.multiple_of(pl.program_id(1) * t_tile, t_tile)
        for s in range(k_chunks):                                  # static unroll
            if x_block_is_full:
                xs = x_ref[pl.ds(t0 + s, t_tile), :]               # (t_tile, chunk)
            else:
                xs = x_ref[...]                                    # (t_tile, n_fft)
            ws = w_ref[s * chunk:(s + 1) * chunk, :]               # (chunk, 2*f_pad), static slice
            acc = acc + jnp.dot(xs, ws, preferred_element_type=jnp.float32)
        real = acc[:, :f_pad]
        imag = acc[:, f_pad:]
        out_ref[...] = real * real + imag * imag
    return kernel


def wave_to_spectrogram(x, n_fft: int, hop_length: int, *, t_tile: int = None,
                        use_bf16: bool = False):
    """x: (B, L) float32 -> (B, 1, T, n_fft//2+1) float32 (center=False, power=2.0)."""
    B, L = x.shape
    n_freq = n_fft // 2 + 1
    T = (L - n_fft) // hop_length + 1
    assert T >= 1, "signal shorter than n_fft"

    f_pad = _round_up(n_freq, 128)                     # lane-dense output / weight halves
    if t_tile is None:
        t_tile = 256 if T >= 256 else _round_up(T, 8)  # single grid step for tiny shapes
    t_tile = _round_up(min(t_tile, _round_up(T, 8)), 8)
    T_pad = _round_up(T, t_tile)
    num_t = T_pad // t_tile

    compute_dtype = jnp.bfloat16 if use_bf16 else jnp.float32
    w = make_dft_basis(n_fft, f_pad, dtype=compute_dtype)

    divisible = (n_fft % hop_length == 0)
    if divisible:
        # In-kernel framing from the raw waveform (no HBM amplification).
        k_chunks = n_fft // hop_length
        chunk = hop_length
        n_hops = T_pad + k_chunks - 1
        need = n_hops * hop_length
        if need > L:
            x_w = jnp.pad(x, ((0, 0), (0, need - L)))
        else:
            x_w = x[:, :need]
        x_in = x_w.reshape(B, n_hops, chunk).astype(compute_dtype)
        x_spec = pl.BlockSpec((None, n_hops, chunk), lambda b, t: (b, 0, 0))
        x_block_is_full = True
        x_block_elems = n_hops * chunk
    else:
        # Fallback: frame in JAX (gather), but T-tile the frames input so VMEM stays bounded.
        k_chunks = 1
        chunk = n_fft
        idx = (jnp.arange(T_pad) * hop_length)[:, None] + jnp.arange(n_fft)[None, :]
        idx = jnp.minimum(idx, L - 1)                  # clamp padded rows (sliced off later)
        x_in = x[:, idx].astype(compute_dtype)         # (B, T_pad, n_fft)
        x_spec = pl.BlockSpec((None, t_tile, chunk), lambda b, t: (b, t, 0))
        x_block_is_full = False
        x_block_elems = t_tile * chunk

    kernel = _make_kernel(k_chunks, chunk, f_pad, t_tile, x_block_is_full)

    # VMEM budget: double-buffered x / w / out blocks + f32 accumulator temp + margin.
    in_itemsize = jnp.dtype(compute_dtype).itemsize
    est = (2 * x_block_elems * in_itemsize
           + 2 * (n_fft * 2 * f_pad) * in_itemsize
           + 2 * (t_tile * f_pad) * 4
           + (t_tile * 2 * f_pad) * 4
           + (4 << 20))
    try:
        vmem_cap = int(pltpu.get_tpu_info().vmem_capacity_bytes)
    except Exception:
        vmem_cap = 64 * 1024 * 1024
    vmem_limit = int(min(max(est, 32 * 1024 * 1024), int(0.9 * vmem_cap)))

    grid_spec = pltpu.PrefetchScalarGridSpec(
        num_scalar_prefetch=0,
        grid=(B, num_t),
        in_specs=[
            x_spec,
            pl.BlockSpec((n_fft, 2 * f_pad), lambda b, t: (0, 0)),   # weight resident, never re-fetched
        ],
        out_specs=pl.BlockSpec((None, t_tile, f_pad), lambda b, t: (b, t, 0)),
    )

    spec = pl.pallas_call(
        kernel,
        out_shape=jax.ShapeDtypeStruct((B, T_pad, f_pad), jnp.float32),
        grid_spec=grid_spec,
        compiler_params=pltpu.CompilerParams(
            dimension_semantics=("parallel", "parallel"),
            vmem_limit_bytes=vmem_limit),
    )(x_in, w)

    # Slice off T / frequency padding, add the channel dim (B, 1, T, F) like PyTorch.
    return spec[:, None, :T, :n_freq]


def _reference(x, n_fft, hop_length):
    """Pure-JAX reference (same math as torchlibrosa Spectrogram, center=False, power=2)."""
    B, L = x.shape
    T = (L - n_fft) // hop_length + 1
    idx = (jnp.arange(T) * hop_length)[:, None] + jnp.arange(n_fft)[None, :]
    frames = x[:, idx]
    n = np.arange(n_fft, dtype=np.float64)
    window = 0.5 - 0.5 * np.cos(2.0 * np.pi * n / n_fft)
    n_freq = n_fft // 2 + 1
    k = np.arange(n_freq, dtype=np.float64)
    ang = 2.0 * np.pi * np.outer(n, k) / n_fft
    wr = jnp.asarray(np.cos(ang) * window[:, None], jnp.float32)
    wi = jnp.asarray(-np.sin(ang) * window[:, None], jnp.float32)
    real = jnp.einsum("btn,nf->btf", frames, wr)
    imag = jnp.einsum("btn,nf->btf", frames, wi)
    return (real ** 2 + imag ** 2)[:, None, :, :]


if __name__ == "__main__":
    key = jax.random.PRNGKey(0)
    B, L = 2, 256
    x = jax.random.normal(key, (B, L), dtype=jnp.float32)

    # Path 1: hop divides n_fft -> in-kernel framing from the raw waveform.
    n_fft, hop = 64, 16
    out = jax.block_until_ready(wave_to_spectrogram(x, n_fft, hop))
    ref = _reference(x, n_fft, hop)
    T = (L - n_fft) // hop + 1
    assert out.shape == (B, 1, T, n_fft // 2 + 1), out.shape
    np.testing.assert_allclose(np.asarray(out), np.asarray(ref), rtol=1e-4, atol=1e-4)

    # Path 2: hop does not divide n_fft -> JAX-side framing, T-tiled kernel.
    n_fft2, hop2 = 64, 24
    out2 = jax.block_until_ready(wave_to_spectrogram(x, n_fft2, hop2))
    ref2 = _reference(x, n_fft2, hop2)
    T2 = (L - n_fft2) // hop2 + 1
    assert out2.shape == (B, 1, T2, n_fft2 // 2 + 1), out2.shape
    np.testing.assert_allclose(np.asarray(out2), np.asarray(ref2), rtol=1e-4, atol=1e-4)

    print("KERNEL_OK")
</pallas_src>

<mosaic_0001>
module attributes {stable_mosaic.version = 11 : i64} {
  func.func @kernel(%arg0: i32, %arg1: i32, %arg2: memref<1x19x16xf32, #tpu.memory_space<vmem>>, %arg3: memref<64x256xf32, #tpu.memory_space<vmem>>, %arg4: memref<1x16x128xf32, #tpu.memory_space<vmem>>) attributes {dimension_semantics = [#tpu.dimension_semantics<parallel>, #tpu.dimension_semantics<parallel>], iteration_bounds = array<i64: 2, 1>, scalar_prefetch = 0 : i64, scratch_operands = 0 : i64, tpu.core_type = #tpu.core_type<tc>, window_params = [{transform_indices = @transform_0, window_bounds = array<i64: 1, 19, 16>}, {pipeline_mode = #tpu.pipeline_mode<synchronous>, transform_indices = @transform_1, window_bounds = array<i64: 64, 256>}, {transform_indices = @transform_2, window_bounds = array<i64: 1, 16, 128>}]} {
    %cst = arith.constant 0.000000e+00 : f32
    %0 = vector.broadcast %cst : f32 to vector<16x256xf32>
    %c16_i32 = arith.constant 16 : i32
    %1 = arith.muli %arg1, %c16_i32 : i32
    %2 = tpu.assume_multiple %1, 16 : i32
    %c0_i32 = arith.constant 0 : i32
    %3 = arith.addi %2, %c0_i32 : i32
    %c0 = arith.constant 0 : index
    %4 = arith.index_cast %3 : i32 to index
    %c0_0 = arith.constant 0 : index
    %5 = vector.load %arg2[%c0, %4, %c0_0] : memref<1x19x16xf32, #tpu.memory_space<vmem>>, vector<1x16x16xf32>
    %6 = vector.shape_cast %5 : vector<1x16x16xf32> to vector<16x16xf32>
    %c0_1 = arith.constant 0 : index
    %c0_2 = arith.constant 0 : index
    %7 = vector.load %arg3[%c0_1, %c0_2] : memref<64x256xf32, #tpu.memory_space<vmem>>, vector<16x256xf32>
    %cst_3 = arith.constant dense<0.000000e+00> : vector<16x256xf32>
    %8 = tpu.matmul %6, %7, %cst_3 {dimension_numbers = #tpu.dot_dimension_numbers<[1], [0], [0], [1], [0, 0, 1, 1], [], []>} : vector<16x16xf32>, vector<16x256xf32>, vector<16x256xf32> -> vector<16x256xf32>
    %9 = arith.addf %0, %8 : vector<16x256xf32>
    %c1_i32 = arith.constant 1 : i32
    %10 = arith.addi %2, %c1_i32 : i32
    %c0_4 = arith.constant 0 : index
    %11 = arith.index_cast %10 : i32 to index
    %c0_5 = arith.constant 0 : index
    %12 = vector.load %arg2[%c0_4, %11, %c0_5] : memref<1x19x16xf32, #tpu.memory_space<vmem>>, vector<1x16x16xf32>
    %13 = vector.shape_cast %12 : vector<1x16x16xf32> to vector<16x16xf32>
    %c16 = arith.constant 16 : index
    %c0_6 = arith.constant 0 : index
    %14 = vector.load %arg3[%c16, %c0_6] : memref<64x256xf32, #tpu.memory_space<vmem>>, vector<16x256xf32>
    %cst_7 = arith.constant dense<0.000000e+00> : vector<16x256xf32>
    %15 = tpu.matmul %13, %14, %cst_7 {dimension_numbers = #tpu.dot_dimension_numbers<[1], [0], [0], [1], [0, 0, 1, 1], [], []>} : vector<16x16xf32>, vector<16x256xf32>, vector<16x256xf32> -> vector<16x256xf32>
    %16 = arith.addf %9, %15 : vector<16x256xf32>
    %c2_i32 = arith.constant 2 : i32
    %17 = arith.addi %2, %c2_i32 : i32
    %c0_8 = arith.constant 0 : index
    %18 = arith.index_cast %17 : i32 to index
    %c0_9 = arith.constant 0 : index
    %19 = vector.load %arg2[%c0_8, %18, %c0_9] : memref<1x19x16xf32, #tpu.memory_space<vmem>>, vector<1x16x16xf32>
    %20 = vector.shape_cast %19 : vector<1x16x16xf32> to vector<16x16xf32>
    %c32 = arith.constant 32 : index
    %c0_10 = arith.constant 0 : index
    %21 = vector.load %arg3[%c32, %c0_10] : memref<64x256xf32, #tpu.memory_space<vmem>>, vector<16x256xf32>
    %cst_11 = arith.constant dense<0.000000e+00> : vector<16x256xf32>
    %22 = tpu.matmul %20, %21, %cst_11 {dimension_numbers = #tpu.dot_dimension_numbers<[1], [0], [0], [1], [0, 0, 1, 1], [], []>} : vector<16x16xf32>, vector<16x256xf32>, vector<16x256xf32> -> vector<16x256xf32>
    %23 = arith.addf %16, %22 : vector<16x256xf32>
    %c3_i32 = arith.constant 3 : i32
    %24 = arith.addi %2, %c3_i32 : i32
    %c0_12 = arith.constant 0 : index
    %25 = arith.index_cast %24 : i32 to index
    %c0_13 = arith.constant 0 : index
    %26 = vector.load %arg2[%c0_12, %25, %c0_13] : memref<1x19x16xf32, #tpu.memory_space<vmem>>, vector<1x16x16xf32>
    %27 = vector.shape_cast %26 : vector<1x16x16xf32> to vector<16x16xf32>
    %c48 = arith.constant 48 : index
    %c0_14 = arith.constant 0 : index
    %28 = vector.load %arg3[%c48, %c0_14] : memref<64x256xf32, #tpu.memory_space<vmem>>, vector<16x256xf32>
    %cst_15 = arith.constant dense<0.000000e+00> : vector<16x256xf32>
    %29 = tpu.matmul %27, %28, %cst_15 {dimension_numbers = #tpu.dot_dimension_numbers<[1], [0], [0], [1], [0, 0, 1, 1], [], []>} : vector<16x16xf32>, vector<16x256xf32>, vector<16x256xf32> -> vector<16x256xf32>
    %30 = arith.addf %23, %29 : vector<16x256xf32>
    %31 = vector.extract_strided_slice %30 {offsets = [0, 0], sizes = [16, 128], strides = [1, 1]} : vector<16x256xf32> to vector<16x128xf32>
    %32 = vector.extract_strided_slice %30 {offsets = [0, 128], sizes = [16, 128], strides = [1, 1]} : vector<16x256xf32> to vector<16x128xf32>
    %33 = arith.mulf %31, %31 : vector<16x128xf32>
    %34 = arith.mulf %32, %32 : vector<16x128xf32>
    %35 = arith.addf %33, %34 : vector<16x128xf32>
    %c0_16 = arith.constant 0 : index
    %c0_17 = arith.constant 0 : index
    %c0_18 = arith.constant 0 : index
    %36 = vector.load %arg4[%c0_16, %c0_17, %c0_18] : memref<1x16x128xf32, #tpu.memory_space<vmem>>, vector<1x16x128xf32>
    %37 = vector.shape_cast %36 : vector<1x16x128xf32> to vector<16x128xf32>
    %38 = vector.shape_cast %35 : vector<16x128xf32> to vector<1x16x128xf32>
    tpu.vector_store %arg4[%c0_16, %c0_17, %c0_18], %38 {strides = array<i32>} : memref<1x16x128xf32, #tpu.memory_space<vmem>>, vector<1x16x128xf32>,
    return
  }
  func.func @transform_0(%arg0: i32, %arg1: i32) -> (i32, i32, i32) {
    %c0_i32 = arith.constant 0 : i32
    %c0_i32_0 = arith.constant 0 : i32
    %c0_i32_1 = arith.constant 0 : i32
    return %arg0, %c0_i32, %c0_i32_0 : i32, i32, i32
  }
  func.func @transform_1(%arg0: i32, %arg1: i32) -> (i32, i32) {
    %c0_i32 = arith.constant 0 : i32
    %c0_i32_0 = arith.constant 0 : i32
    %c0_i32_1 = arith.constant 0 : i32
    return %c0_i32, %c0_i32_0 : i32, i32
  }
  func.func @transform_2(%arg0: i32, %arg1: i32) -> (i32, i32, i32) {
    %c0_i32 = arith.constant 0 : i32
    %c0_i32_0 = arith.constant 0 : i32
    return %arg0, %arg1, %c0_i32 : i32, i32, i32
  }
}

</mosaic_0001>

<llo_original>
// kernel: tpu_custom_call.1
$region0: #{tpu_custom_call.1}
  #allocation0 [shape = 'u32[]', space=smem, size = 0x4, offset = 0x4, fixed_abs, tag = 'smem constant byte address 0x4 - core index']
  #allocation1 [shape = 'u32[144,128]{1,0:T(1,128)}', space=vmem, size = 0x12000, scoped, tag = 'internal scratch']
  %s0 = inlined_call_operand.vmem [shape: f32[2,19,16], index: 0, kind: input, shape index: {}]
  %s1 = inlined_call_operand.hbm [shape: f32[64,256], index: 1, kind: input, shape index: {}]
  %s2 = inlined_call_operand.hbm [shape: f32[2,16,128], index: 2, kind: output, shape index: {}]
  %s3 = sld [smem:[#allocation0]]
  $region45: #{tpu_custom_call.1} parent=0
    _
  %s5 = ssub.s32 1, %s3
  %s6 = scalar_select 0, %s5, %s3
  $region1: #{tpu_custom_call.1} parent=0
    #allocation2 [shape = 'u8[65536]{0}', space=vmem, size = 0x10000, scoped, tag = 'input window, operand 1, single buffered']
    #allocation3 [shape = 's32[2]{0}', space=sflag, size = 0x8, scoped, tag = 'scoped memory for tpu_custom_call.1']
    #allocation4 [shape = 's32[2]{0}', space=sflag, size = 0x8, scoped, tag = 'scoped memory for tpu_custom_call.1']
    #allocation5 [shape = 'u8[16384]{0}', space=vmem, size = 0x4000, scoped, tag = 'output window, operand 0']
    %7 = vsyncpa [#allocation3], 0
    %8 = vsyncpa [#allocation4], 0
    %s9 = scalar_lea.sflag [#allocation4], 1
    %10 = vsyncpa %s9, 0
    loop: start=0, step=1, limit=4
    $region2: #{tpu_custom_call.1} parent=1 // loop_pre_header
      _
    $region3: #{tpu_custom_call.1} parent=1 // loop_header
      %s12 = sphi 0, %s16
      %p13 = scmp.ge.s32.totalorder %s12, 4
      %s19 = sphi 0, %s31
      %s20 = sphi 0, %s27
      %s21 = sphi 0, %s19
      %s22 = sphi 0, %s20
      %s23 = sphi 0, %s21
      %s24 = sphi 0, %s22
      %s34 = sphi 0, %s36
      %s37 = sphi 0, %s34
      %s38 = sphi 0, %s37
      %s54 = sphi 0, %s38
      %s58 = sphi 0, %s58
      %s60 = sphi 0, %s58
      %s61 = sphi 0, %s60
      %s75 = sphi 0, %s61
      %s83 = sphi 0, %s85
      %s86 = sphi 0, %s83
      %s87 = sphi 0, %s86
      %s103 = sphi 0, %s87
    $region4: #{tpu_custom_call.1} parent=1 // loop_header_branch
      %15 = sbr.rel (%p13) target = $region8
    $region5: #{tpu_custom_call.1} parent=1 // loop_body
      %s17 = ssub.s32 %s12, 1
      %s18 = ssub.s32 %s12, 2
      %s25 = sadd.s32 1, %s20
      %p26 = scmp.ge.s32.totalorder %s25, 1
      %s27 = scalar_select %p26, 0, %s25
      %s28 = sadd.s32 1, %s19
      %s29 = scalar_select %p26, %s28, %s19
      %p30 = scmp.ge.s32.totalorder %s29, 2
      %s31 = scalar_select %p30, 0, %s29
      %s32 = ssub.s32 %s19, %s31
      %p33 = scmp.eq.s32.totalorder %s32, 0
      %s35 = sadd.s32 %s34, 1
      %s36 = scalar_select %p33, %s34, %s35
      %p39 = pneg %p33
      %p40 = scmp.eq.s32.totalorder %s12, 1
      %p41 = por %p39, %p40
      %p42 = scmp.ne.s32.totalorder %s34, %s37
      %p43 = scmp.eq.s32.totalorder %s12, 0
      %p44 = por %p42, %p43
      %p45 = scmp.ne.s32.totalorder %s34, %s37
      %p46 = scmp.eq.s32.totalorder %s17, 1
      %p47 = por %p45, %p46
      %p48 = scmp.ne.s32.totalorder %s37, %s38
      %p49 = scmp.eq.s32.totalorder %s17, 0
      %p50 = por %p48, %p49
      %p51 = scmp.ne.s32.totalorder %s37, %s38
      %p52 = scmp.eq.s32.totalorder %s18, 1
      %p53 = por %p51, %p52
      %p55 = scmp.ne.s32.totalorder %s38, %s54
      %p56 = scmp.eq.s32.totalorder %s18, 0
      %p57 = por %p55, %p56
      %s59 = sadd.s32 %s58, 1
      %p62 = scmp.eq.s32.totalorder %s12, 1
      %p63 = scmp.ne.s32.totalorder %s58, %s60
      %p64 = scmp.eq.s32.totalorder %s12, 0
      %p65 = por %p63, %p64
      %p66 = scmp.ne.s32.totalorder %s58, %s60
      %p67 = scmp.eq.s32.totalorder %s17, 1
      %p68 = por %p66, %p67
      %p69 = scmp.ne.s32.totalorder %s60, %s61
      %p70 = scmp.eq.s32.totalorder %s17, 0
      %p71 = por %p69, %p70
      %p72 = scmp.ne.s32.totalorder %s60, %s61
      %p73 = scmp.eq.s32.totalorder %s18, 1
      %p74 = por %p72, %p73
      %p76 = scmp.ne.s32.totalorder %s61, %s75
      %p77 = scmp.eq.s32.totalorder %s18, 0
      %p78 = por %p76, %p77
      %s79 = ssub.s32 %s19, %s31
      %s80 = ssub.s32 %s20, %s27
      %s81 = sor.u32 %s79, %s80
      %p82 = scmp.eq.s32.totalorder %s81, 0
      %s84 = sadd.s32 %s83, 1
      %s85 = scalar_select %p82, %s83, %s84
      %p88 = pneg %p82
      %p89 = scmp.eq.s32.totalorder %s12, 1
      %p90 = por %p88, %p89
      %p91 = scmp.ne.s32.totalorder %s83, %s86
      %p92 = scmp.eq.s32.totalorder %s12, 0
      %p93 = por %p91, %p92
      %p94 = scmp.ne.s32.totalorder %s83, %s86
      %p95 = scmp.eq.s32.totalorder %s17, 1
      %p96 = por %p94, %p95
      %p97 = scmp.ne.s32.totalorder %s86, %s87
      %p98 = scmp.eq.s32.totalorder %s17, 0
      %p99 = por %p97, %p98
      %p100 = scmp.ne.s32.totalorder %s86, %s87
      %p101 = scmp.eq.s32.totalorder %s18, 1
      %p102 = por %p100, %p101
      %p104 = scmp.ne.s32.totalorder %s87, %s103
      %p105 = scmp.eq.s32.totalorder %s18, 0
      %p106 = por %p104, %p105
      %p107 = scmp.le.s32.totalorder 1, %s12
      %p108 = scmp.lt.s32.totalorder %s12, 3
      %p109 = pnand %p107, %p108
      %p110 = pneg %p109
      // Predicated region
      $region9: #{tpu_custom_call.1} parent=5 // pred_check
        _
      $region10: #{tpu_custom_call.1} parent=5 // pred_check_branch
        %112 = sbr.rel (%p109) target = $region12
      $region11: #{tpu_custom_call.1} parent=5 // pred_region
        %s113 = ssub.s32 %s12, 1
        // Predicated region
        $region13: #{tpu_custom_call.1} parent=11 // pred_check
          %p114 = pneg %p71
        $region14: #{tpu_custom_call.1} parent=11 // pred_check_branch
          %116 = sbr.rel (%p114) target = $region16
        $region15: #{tpu_custom_call.1} parent=11 // pred_region
          %s118 = ssub.s32 2048, 2048
          %119 = vsyncadd [#allocation3], %s118
          %s120 = sshll.u32 [#allocation2], 4
          %s121 = int_to_ptr.vmem [resolvable:$true] %s120
          %126 = dma.hbm_to_vmem [thread:$0]  %s1, 2048, %s121, [#allocation3], 256, 256, 16
        $region16: #{tpu_custom_call.1} parent=11 // pred_fallthru
          _
      $region12: #{tpu_custom_call.1} parent=5 // pred_fallthru
        _
      %p127 = scmp.lt.s32.totalorder %s12, 2
      // Predicated region
      $region17: #{tpu_custom_call.1} parent=5 // pred_check
        %p128 = pneg %p127
      $region18: #{tpu_custom_call.1} parent=5 // pred_check_branch
        %130 = sbr.rel (%p128) target = $region20
      $region19: #{tpu_custom_call.1} parent=5 // pred_region
        // Predicated region
        $region21: #{tpu_custom_call.1} parent=19 // pred_check
          %p131 = pneg %p44
        $region22: #{tpu_custom_call.1} parent=19 // pred_check_branch
          %133 = sbr.rel (%p131) target = $region24
        $region23: #{tpu_custom_call.1} parent=19 // pred_region
          %p134 = scmp.lt.s32.totalorder %s19, 1
          %s135 = scalar_select %p134, %s19, 1
          %s136 = smul.addr %s135, 3
          %s137 = smul.addr %s136, 8
          %s138 = scalar_lea.vmem %s0, %s137
        $region24: #{tpu_custom_call.1} parent=19 // pred_fallthru
          _
      $region20: #{tpu_custom_call.1} parent=5 // pred_fallthru
        _
      %p139 = scmp.le.s32.totalorder 1, %s12
      %p140 = scmp.lt.s32.totalorder %s12, 3
      %p141 = pnand %p139, %p140
      %p142 = pneg %p141
      // Predicated region
      $region25: #{tpu_custom_call.1} parent=5 // pred_check
        _
      $region26: #{tpu_custom_call.1} parent=5 // pred_check_branch
        %144 = sbr.rel (%p141) target = $region28
      $region27: #{tpu_custom_call.1} parent=5 // pred_region
        %s145 = ssub.s32 %s12, 1
        // Predicated region
        $region29: #{tpu_custom_call.1} parent=27 // pred_check
          %p146 = pneg %p71
        $region30: #{tpu_custom_call.1} parent=27 // pred_check_branch
          %148 = sbr.rel (%p146) target = $region32
        $region31: #{tpu_custom_call.1} parent=27 // pred_region
          %149 = dma.done [#allocation3], 2048
        $region32: #{tpu_custom_call.1} parent=27 // pred_fallthru
          _
        %p150 = scmp.lt.s32.totalorder %s21, 1
        %s151 = scalar_select %p150, %s21, 1
        %s152 = smul.addr %s151, 3
        %s153 = smul.addr %s152, 8
        %s154 = scalar_lea.vmem %s0, %s153
        %p155 = pneg %p50
        %p156 = pneg %p47
        %p157 = pneg %p71
        %p158 = pneg %p68
        %p159 = pneg %p99
        %p160 = pneg %p96
        %s161 = sand.u32 %s86, 1
        %s162 = scalar_lea.sflag [#allocation4], %s161
        %s163 = sand.u32 %s86, 1
        %s164 = smul.addr %s163, 16
        %s165 = scalar_lea.vmem [#allocation5], %s164
        %p166 = scmp.lt.s32.totalorder %s21, 1
        %s167 = scalar_select %p166, %s21, 1
        %s168 = smul.addr %s167, 3
        %s169 = smul.addr %s168, 8
        %s170 = scalar_lea.vmem %s0, %s169
        %s171 = smul.u32 2, %s22
        %s172 = smul.u32 %s22, 16
        %s173 = scalar_lea.vmem %s170, %s172
        %v174 = vld [vmem:[%s173] sm:$0xff]
        %v175 = vld [vmem:[%s173 + $0x8] sm:$0xff]
        %v176 = vld [vmem:[#allocation2] sm:$0xff]
        %v177 = vld [vmem:[#allocation2 + $0x8] sm:$0xff]
        %v178 = vld [vmem:[#allocation2 + $0x10] sm:$0xff]
        %v179 = vld [vmem:[#allocation2 + $0x18] sm:$0xff]
        %s180 = sadd.s32 %s172, 1
        %s181 = scalar_lea.vmem %s170, %s180
        %v182 = vld [vmem:[%s181] sm:$0xff]
        %v183 = vld [vmem:[%s181 + $0x8] sm:$0xff]
        %v184 = vld [vmem:[#allocation2 + $0x20] sm:$0xff]
        %v185 = vld [vmem:[#allocation2 + $0x28] sm:$0xff]
        %v186 = vld [vmem:[#allocation2 + $0x30] sm:$0xff]
        %v187 = vld [vmem:[#allocation2 + $0x38] sm:$0xff]
        %vm188 = vcmask 130048
        %v190 = vsel %vm188, %v182, 0
        %v193 = vsel %vm188, %v183, 0
        %195 = vmatprep.subr.mxu0 0.0
        %196 = vmatpush1.msra.mxu0 0.0
        %197 = vmatprep.subr.mxu0 0.0
        %198 = vmatpush1.msra.mxu0 0.0
        %199 = vmatprep.subr.mxu0 0.0
        %200 = vmatpush1.msra.mxu0 0.0
        %201 = vmatprep.subr.mxu0 0.0
        %202 = vmatpush1.msra.mxu0 0.0
        %203 = vmatprep.subr.mxu0 0.0
        %204 = vmatpush1.msra.mxu0 0.0
        %205 = vmatprep.subr.mxu0 0.0
        %206 = vmatpush1.msra.mxu0 0.0
        %207 = vmatprep.subr.mxu0 0.0
        %208 = vmatpush1.msra.mxu0 0.0
        %209 = vmatprep.subr.mxu0 0.0
        %210 = vmatpush1.msra.mxu0 0.0
        %211 = vmatprep.subr.mxu0 0.0
        %212 = vmatpush1.msra.mxu0 0.0
        %213 = vmatprep.subr.mxu0 0.0
        %214 = vmatpush1.msra.mxu0 0.0
        %215 = vmatprep.subr.mxu0 0.0
        %216 = vmatpush1.msra.mxu0 0.0
        %217 = vmatprep.subr.mxu0 0.0
        %218 = vmatpush1.msra.mxu0 0.0
        %219 = vmatprep.subr.mxu0 0.0
        %220 = vmatpush1.msra.mxu0 0.0
        %221 = vmatprep.subr.mxu0 0.0
        %222 = vmatpush1.msra.mxu0 0.0
        %223 = vmatprep.subr.mxu0 %v187
        %224 = vmatpush1.msra.mxu0 %v186
        %225 = vmatprep.subr.mxu0 %v185
        %226 = vmatpush1.msra.mxu0 %v184
        %227 = vmatprep.subr.mxu0 0.0
        %228 = vmatpush2.msra.mxu0 0.0
        %229 = vmatprep.subr.mxu0 0.0
        %230 = vmatpush2.msra.mxu0 0.0
        %231 = vmatprep.subr.mxu0 0.0
        %232 = vmatpush2.msra.mxu0 0.0
        %233 = vmatprep.subr.mxu0 0.0
        %234 = vmatpush2.msra.mxu0 0.0
        %235 = vmatprep.subr.mxu0 0.0
        %236 = vmatpush2.msra.mxu0 0.0
        %237 = vmatprep.subr.mxu0 0.0
        %238 = vmatpush2.msra.mxu0 0.0
        %239 = vmatprep.subr.mxu0 0.0
        %240 = vmatpush2.msra.mxu0 0.0
        %241 = vmatprep.subr.mxu0 0.0
        %242 = vmatpush2.msra.mxu0 0.0
        %243 = vmatprep.subr.mxu0 0.0
        %244 = vmatpush2.msra.mxu0 0.0
        %245 = vmatprep.subr.mxu0 0.0
        %246 = vmatpush2.msra.mxu0 0.0
        %247 = vmatprep.subr.mxu0 0.0
        %248 = vmatpush2.msra.mxu0 0.0
        %249 = vmatprep.subr.mxu0 0.0
        %250 = vmatpush2.msra.mxu0 0.0
        %251 = vmatprep.subr.mxu0 0.0
        %252 = vmatpush2.msra.mxu0 0.0
        %253 = vmatprep.subr.mxu0 0.0
        %254 = vmatpush2.msra.mxu0 0.0
        %255 = vmatprep.subr.mxu0 0.0
        %256 = vmatpush2.msra.mxu0 0.0
        %257 = vmatprep.subr.mxu0 0.0
        %258 = vmatpush2.msra.mxu0 0.0
        %259 = vmatprep.mubr.f32.mxu0 0.0
        %260 = vmatmul.mubr.f32.gmra.mxu0 %v190
        %v261 = vpop.f32.mrf.mxu0
        %v262 = vadd.f32 0.0, %v261
        %v263 = vpop.f32.mrf.mxu0
        %v264 = vadd.f32 0.0, %v263
        %265 = vmatprep.mubr.f32.mxu0 0.0
        %266 = vmatmul.mubr.f32.gmra.mxu0 %v193
        %v267 = vpop.f32.mrf.mxu0
        %v268 = vadd.f32 0.0, %v267
        %v269 = vpop.f32.mrf.mxu0
        %v270 = vadd.f32 0.0, %v269
        %271 = vdwg.mxu0
        %v273 = vsel %vm188, %v174, 0
        %v276 = vsel %vm188, %v175, 0
        %278 = vmatprep.subr.mxu0 0.0
        %279 = vmatpush1.msra.mxu0 0.0
        %280 = vmatprep.subr.mxu0 0.0
        %281 = vmatpush1.msra.mxu0 0.0
        %282 = vmatprep.subr.mxu0 0.0
        %283 = vmatpush1.msra.mxu0 0.0
        %284 = vmatprep.subr.mxu0 0.0
        %285 = vmatpush1.msra.mxu0 0.0
        %286 = vmatprep.subr.mxu0 0.0
        %287 = vmatpush1.msra.mxu0 0.0
        %288 = vmatprep.subr.mxu0 0.0
        %289 = vmatpush1.msra.mxu0 0.0
        %290 = vmatprep.subr.mxu0 0.0
        %291 = vmatpush1.msra.mxu0 0.0
        %292 = vmatprep.subr.mxu0 0.0
        %293 = vmatpush1.msra.mxu0 0.0
        %294 = vmatprep.subr.mxu0 0.0
        %295 = vmatpush1.msra.mxu0 0.0
        %296 = vmatprep.subr.mxu0 0.0
        %297 = vmatpush1.msra.mxu0 0.0
        %298 = vmatprep.subr.mxu0 0.0
        %299 = vmatpush1.msra.mxu0 0.0
        %300 = vmatprep.subr.mxu0 0.0
        %301 = vmatpush1.msra.mxu0 0.0
        %302 = vmatprep.subr.mxu0 0.0
        %303 = vmatpush1.msra.mxu0 0.0
        %304 = vmatprep.subr.mxu0 0.0
        %305 = vmatpush1.msra.mxu0 0.0
        %306 = vmatprep.subr.mxu0 %v179
        %307 = vmatpush1.msra.mxu0 %v178
        %308 = vmatprep.subr.mxu0 %v177
        %309 = vmatpush1.msra.mxu0 %v176
        %310 = vmatprep.subr.mxu0 0.0
        %311 = vmatpush2.msra.mxu0 0.0
        %312 = vmatprep.subr.mxu0 0.0
        %313 = vmatpush2.msra.mxu0 0.0
        %314 = vmatprep.subr.mxu0 0.0
        %315 = vmatpush2.msra.mxu0 0.0
        %316 = vmatprep.subr.mxu0 0.0
        %317 = vmatpush2.msra.mxu0 0.0
        %318 = vmatprep.subr.mxu0 0.0
        %319 = vmatpush2.msra.mxu0 0.0
        %320 = vmatprep.subr.mxu0 0.0
        %321 = vmatpush2.msra.mxu0 0.0
        %322 = vmatprep.subr.mxu0 0.0
        %323 = vmatpush2.msra.mxu0 0.0
        %324 = vmatprep.subr.mxu0 0.0
        %325 = vmatpush2.msra.mxu0 0.0
        %326 = vmatprep.subr.mxu0 0.0
        %327 = vmatpush2.msra.mxu0 0.0
        %328 = vmatprep.subr.mxu0 0.0
        %329 = vmatpush2.msra.mxu0 0.0
        %330 = vmatprep.subr.mxu0 0.0
        %331 = vmatpush2.msra.mxu0 0.0
        %332 = vmatprep.subr.mxu0 0.0
        %333 = vmatpush2.msra.mxu0 0.0
        %334 = vmatprep.subr.mxu0 0.0
        %335 = vmatpush2.msra.mxu0 0.0
        %336 = vmatprep.subr.mxu0 0.0
        %337 = vmatpush2.msra.mxu0 0.0
        %338 = vmatprep.subr.mxu0 0.0
        %339 = vmatpush2.msra.mxu0 0.0
        %340 = vmatprep.subr.mxu0 0.0
        %341 = vmatpush2.msra.mxu0 0.0
        %342 = vmatprep.mubr.f32.mxu0 0.0
        %343 = vmatmul.mubr.f32.gmra.mxu0 %v273
        %v344 = vpop.f32.mrf.mxu0
        %v345 = vadd.f32 %v262, %v344
        %v346 = vpop.f32.mrf.mxu0
        %v347 = vadd.f32 %v264, %v346
        %348 = vmatprep.mubr.f32.mxu0 0.0
        %349 = vmatmul.mubr.f32.gmra.mxu0 %v276
        %v350 = vpop.f32.mrf.mxu0
        %v351 = vadd.f32 %v268, %v350
        %v352 = vpop.f32.mrf.mxu0
        %v353 = vadd.f32 %v270, %v352
        %354 = vdwg.mxu0
        %s355 = sadd.s32 %s172, 2
        %s356 = scalar_lea.vmem %s170, %s355
        %v357 = vld [vmem:[%s356] sm:$0xff]
        %v358 = vld [vmem:[%s356 + $0x8] sm:$0xff]
        %v359 = vld [vmem:[#allocation2 + $0x40] sm:$0xff]
        %v360 = vld [vmem:[#allocation2 + $0x48] sm:$0xff]
        %v361 = vld [vmem:[#allocation2 + $0x50] sm:$0xff]
        %v362 = vld [vmem:[#allocation2 + $0x58] sm:$0xff]
        %v364 = vsel %vm188, %v357, 0
        %v367 = vsel %vm188, %v358, 0
        %369 = vmatprep.subr.mxu0 0.0
        %370 = vmatpush1.msra.mxu0 0.0
        %371 = vmatprep.subr.mxu0 0.0
        %372 = vmatpush1.msra.mxu0 0.0
        %373 = vmatprep.subr.mxu0 0.0
        %374 = vmatpush1.msra.mxu0 0.0
        %375 = vmatprep.subr.mxu0 0.0
        %376 = vmatpush1.msra.mxu0 0.0
        %377 = vmatprep.subr.mxu0 0.0
        %378 = vmatpush1.msra.mxu0 0.0
        %379 = vmatprep.subr.mxu0 0.0
        %380 = vmatpush1.msra.mxu0 0.0
        %381 = vmatprep.subr.mxu0 0.0
        %382 = vmatpush1.msra.mxu0 0.0
        %383 = vmatprep.subr.mxu0 0.0
        %384 = vmatpush1.msra.mxu0 0.0
        %385 = vmatprep.subr.mxu0 0.0
        %386 = vmatpush1.msra.mxu0 0.0
        %387 = vmatprep.subr.mxu0 0.0
        %388 = vmatpush1.msra.mxu0 0.0
        %389 = vmatprep.subr.mxu0 0.0
        %390 = vmatpush1.msra.mxu0 0.0
        %391 = vmatprep.subr.mxu0 0.0
        %392 = vmatpush1.msra.mxu0 0.0
        %393 = vmatprep.subr.mxu0 0.0
        %394 = vmatpush1.msra.mxu0 0.0
        %395 = vmatprep.subr.mxu0 0.0
        %396 = vmatpush1.msra.mxu0 0.0
        %397 = vmatprep.subr.mxu0 %v362
        %398 = vmatpush1.msra.mxu0 %v361
        %399 = vmatprep.subr.mxu0 %v360
        %400 = vmatpush1.msra.mxu0 %v359
        %401 = vmatprep.subr.mxu0 0.0
        %402 = vmatpush2.msra.mxu0 0.0
        %403 = vmatprep.subr.mxu0 0.0
        %404 = vmatpush2.msra.mxu0 0.0
        %405 = vmatprep.subr.mxu0 0.0
        %406 = vmatpush2.msra.mxu0 0.0
        %407 = vmatprep.subr.mxu0 0.0
        %408 = vmatpush2.msra.mxu0 0.0
        %409 = vmatprep.subr.mxu0 0.0
        %410 = vmatpush2.msra.mxu0 0.0
        %411 = vmatprep.subr.mxu0 0.0
        %412 = vmatpush2.msra.mxu0 0.0
        %413 = vmatprep.subr.mxu0 0.0
        %414 = vmatpush2.msra.mxu0 0.0
        %415 = vmatprep.subr.mxu0 0.0
        %416 = vmatpush2.msra.mxu0 0.0
        %417 = vmatprep.subr.mxu0 0.0
        %418 = vmatpush2.msra.mxu0 0.0
        %419 = vmatprep.subr.mxu0 0.0
        %420 = vmatpush2.msra.mxu0 0.0
        %421 = vmatprep.subr.mxu0 0.0
        %422 = vmatpush2.msra.mxu0 0.0
        %423 = vmatprep.subr.mxu0 0.0
        %424 = vmatpush2.msra.mxu0 0.0
        %425 = vmatprep.subr.mxu0 0.0
        %426 = vmatpush2.msra.mxu0 0.0
        %427 = vmatprep.subr.mxu0 0.0
        %428 = vmatpush2.msra.mxu0 0.0
        %429 = vmatprep.subr.mxu0 0.0
        %430 = vmatpush2.msra.mxu0 0.0
        %431 = vmatprep.subr.mxu0 0.0
        %432 = vmatpush2.msra.mxu0 0.0
        %433 = vmatprep.mubr.f32.mxu0 0.0
        %434 = vmatmul.mubr.f32.gmra.mxu0 %v364
        %v435 = vpop.f32.mrf.mxu0
        %v436 = vadd.f32 0.0, %v435
        %v437 = vpop.f32.mrf.mxu0
        %v438 = vadd.f32 0.0, %v437
        %439 = vmatprep.mubr.f32.mxu0 0.0
        %440 = vmatmul.mubr.f32.gmra.mxu0 %v367
        %v441 = vpop.f32.mrf.mxu0
        %v442 = vadd.f32 0.0, %v441
        %v443 = vpop.f32.mrf.mxu0
        %v444 = vadd.f32 0.0, %v443
        %445 = vdwg.mxu0
        %v446 = vadd.f32 %v345, %v436
        %v447 = vadd.f32 %v347, %v438
        %v448 = vadd.f32 %v351, %v442
        %v449 = vadd.f32 %v353, %v444
        %s450 = sadd.s32 %s172, 3
        %s451 = scalar_lea.vmem %s170, %s450
        %v452 = vld [vmem:[%s451] sm:$0xff]
        %v453 = vld [vmem:[%s451 + $0x8] sm:$0xff]
        %v454 = vld [vmem:[#allocation2 + $0x60] sm:$0xff]
        %v455 = vld [vmem:[#allocation2 + $0x68] sm:$0xff]
        %v456 = vld [vmem:[#allocation2 + $0x70] sm:$0xff]
        %v457 = vld [vmem:[#allocation2 + $0x78] sm:$0xff]
        %v459 = vsel %vm188, %v452, 0
        %v462 = vsel %vm188, %v453, 0
        %464 = vmatprep.subr.mxu0 0.0
        %465 = vmatpush1.msra.mxu0 0.0
        %466 = vmatprep.subr.mxu0 0.0
        %467 = vmatpush1.msra.mxu0 0.0
        %468 = vmatprep.subr.mxu0 0.0
        %469 = vmatpush1.msra.mxu0 0.0
        %470 = vmatprep.subr.mxu0 0.0
        %471 = vmatpush1.msra.mxu0 0.0
        %472 = vmatprep.subr.mxu0 0.0
        %473 = vmatpush1.msra.mxu0 0.0
        %474 = vmatprep.subr.mxu0 0.0
        %475 = vmatpush1.msra.mxu0 0.0
        %476 = vmatprep.subr.mxu0 0.0
        %477 = vmatpush1.msra.mxu0 0.0
        %478 = vmatprep.subr.mxu0 0.0
        %479 = vmatpush1.msra.mxu0 0.0
        %480 = vmatprep.subr.mxu0 0.0
        %481 = vmatpush1.msra.mxu0 0.0
        %482 = vmatprep.subr.mxu0 0.0
        %483 = vmatpush1.msra.mxu0 0.0
        %484 = vmatprep.subr.mxu0 0.0
        %485 = vmatpush1.msra.mxu0 0.0
        %486 = vmatprep.subr.mxu0 0.0
        %487 = vmatpush1.msra.mxu0 0.0
        %488 = vmatprep.subr.mxu0 0.0
        %489 = vmatpush1.msra.mxu0 0.0
        %490 = vmatprep.subr.mxu0 0.0
        %491 = vmatpush1.msra.mxu0 0.0
        %492 = vmatprep.subr.mxu0 %v457
        %493 = vmatpush1.msra.mxu0 %v456
        %494 = vmatprep.subr.mxu0 %v455
        %495 = vmatpush1.msra.mxu0 %v454
        %496 = vmatprep.subr.mxu0 0.0
        %497 = vmatpush2.msra.mxu0 0.0
        %498 = vmatprep.subr.mxu0 0.0
        %499 = vmatpush2.msra.mxu0 0.0
        %500 = vmatprep.subr.mxu0 0.0
        %501 = vmatpush2.msra.mxu0 0.0
        %502 = vmatprep.subr.mxu0 0.0
        %503 = vmatpush2.msra.mxu0 0.0
        %504 = vmatprep.subr.mxu0 0.0
        %505 = vmatpush2.msra.mxu0 0.0
        %506 = vmatprep.subr.mxu0 0.0
        %507 = vmatpush2.msra.mxu0 0.0
        %508 = vmatprep.subr.mxu0 0.0
        %509 = vmatpush2.msra.mxu0 0.0
        %510 = vmatprep.subr.mxu0 0.0
        %511 = vmatpush2.msra.mxu0 0.0
        %512 = vmatprep.subr.mxu0 0.0
        %513 = vmatpush2.msra.mxu0 0.0
        %514 = vmatprep.subr.mxu0 0.0
        %515 = vmatpush2.msra.mxu0 0.0
        %516 = vmatprep.subr.mxu0 0.0
        %517 = vmatpush2.msra.mxu0 0.0
        %518 = vmatprep.subr.mxu0 0.0
        %519 = vmatpush2.msra.mxu0 0.0
        %520 = vmatprep.subr.mxu0 0.0
        %521 = vmatpush2.msra.mxu0 0.0
        %522 = vmatprep.subr.mxu0 0.0
        %523 = vmatpush2.msra.mxu0 0.0
        %524 = vmatprep.subr.mxu0 0.0
        %525 = vmatpush2.msra.mxu0 0.0
        %526 = vmatprep.subr.mxu0 0.0
        %527 = vmatpush2.msra.mxu0 0.0
        %528 = vmatprep.mubr.f32.mxu0 0.0
        %529 = vmatmul.mubr.f32.gmra.mxu0 %v459
        %v530 = vpop.f32.mrf.mxu0
        %v531 = vadd.f32 0.0, %v530
        %v532 = vpop.f32.mrf.mxu0
        %v533 = vadd.f32 0.0, %v532
        %534 = vmatprep.mubr.f32.mxu0 0.0
        %535 = vmatmul.mubr.f32.gmra.mxu0 %v462
        %v536 = vpop.f32.mrf.mxu0
        %v537 = vadd.f32 0.0, %v536
        %v538 = vpop.f32.mrf.mxu0
        %v539 = vadd.f32 0.0, %v538
        %540 = vdwg.mxu0
        %v541 = vadd.f32 %v446, %v531
        %v542 = vadd.f32 %v447, %v533
        %v543 = vadd.f32 %v448, %v537
        %v544 = vadd.f32 %v449, %v539
        %v545 = vmul.f32 %v541, %v541
        %v546 = vmul.f32 %v543, %v543
        %v547 = vmul.f32 %v542, %v542
        %v548 = vmul.f32 %v544, %v544
        %v549 = vadd.f32 %v545, %v547
        %v550 = vadd.f32 %v546, %v548
        %551 = vst [vmem:[%s165] sm:$0xff] %v549
        %552 = vst [vmem:[%s165 + $0x8] sm:$0xff] %v550
        %s553 = sand.u32 %s86, 1
        %s554 = scalar_lea.sflag [#allocation4], %s553
        %s555 = sand.u32 %s86, 1
        %s556 = smul.addr %s555, 16
        %s557 = scalar_lea.vmem [#allocation5], %s556
        // Predicated region
        $region33: #{tpu_custom_call.1} parent=27 // pred_check
          %p558 = pneg %p96
        $region34: #{tpu_custom_call.1} parent=27 // pred_check_branch
          %560 = sbr.rel (%p558) target = $region36
        $region35: #{tpu_custom_call.1} parent=27 // pred_region
          %s561 = smul.u32 2, %s22
          %s563 = ssub.s32 256, 256
          %564 = vsyncadd %s554, %s563
          %s565 = smul.addr %s21, 2
          %s566 = sadd.s32 %s561, %s565
          %s567 = smul.addr %s566, 128
          %s568 = scalar_lea.hbm %s2, %s567
          %s569 = sshll.u32 %s557, 4
          %s570 = int_to_ptr.vmem [resolvable:$true] %s569
          %575 = dma.vmem_to_hbm [thread:$0]  %s570, 256, %s568, %s554, 128, 128, 8
        $region36: #{tpu_custom_call.1} parent=27 // pred_fallthru
          _
      $region28: #{tpu_custom_call.1} parent=5 // pred_fallthru
        _
      %p576 = scmp.le.s32.totalorder 2, %s12
      // Predicated region
      $region37: #{tpu_custom_call.1} parent=5 // pred_check
        %p577 = pneg %p576
      $region38: #{tpu_custom_call.1} parent=5 // pred_check_branch
        %579 = sbr.rel (%p577) target = $region40
      $region39: #{tpu_custom_call.1} parent=5 // pred_region
        %s580 = ssub.s32 %s12, 2
        // Predicated region
        $region41: #{tpu_custom_call.1} parent=39 // pred_check
          %p581 = pneg %p102
        $region42: #{tpu_custom_call.1} parent=39 // pred_check_branch
          %583 = sbr.rel (%p581) target = $region44
        $region43: #{tpu_custom_call.1} parent=39 // pred_region
          %s584 = sand.u32 %s87, 1
          %s585 = scalar_lea.sflag [#allocation4], %s584
          %s586 = sand.u32 %s87, 1
          %s587 = smul.addr %s586, 16
          %s588 = scalar_lea.vmem [#allocation5], %s587
          %589 = dma.done %s585, 256
        $region44: #{tpu_custom_call.1} parent=39 // pred_fallthru
          _
      $region40: #{tpu_custom_call.1} parent=5 // pred_fallthru
        _
    $region6: #{tpu_custom_call.1} parent=1 // loop_footer
      %s16 = sadd.s32 1, %s12
    $region7: #{tpu_custom_call.1} parent=1 // loop_footer_branch
      %11 = sbr.rel target = $region3
    $region8: #{tpu_custom_call.1} parent=1 // loop_exit
      _
    %590 = vsyncpa [#allocation3], 1
    %s591 = scalar_lea.sflag [#allocation3], 1
    %592 = vsyncpa %s591, 1
    %593 = vsyncpa [#allocation4], 1
    %s594 = scalar_lea.sflag [#allocation4], 1
    %595 = vsyncpa %s594, 1

</llo_original>
